<compile_context>
chip_gen: v6e
topology: v6e:2x2x1
jax: 0.10.0
libtpu: 0.0.40
codegen_flags: <defaults>
</compile_context>

<pallas_src>
import functools

import jax
import jax.numpy as jnp
from jax.experimental import pallas as pl
from jax.experimental.pallas import tpu as pltpu


def _dag_pool_kernel(bid_ref, h_ref, o_ref, acc_ref, *, num_graphs):
    """Grid = (cores, node tiles). Per-core running max over selected nodes.

    bid_ref: [tn, 1] int32 masked batch id (-1 = not selected / padding)
    h_ref:   [tn, D] node embeddings (f32 or bf16; compute is f32)
    o_ref:   [1, G, D] per-core partial max (written once, on the last tile)
    acc_ref: [G, D] f32 VMEM running-max accumulator
    """
    step = pl.program_id(1)
    neg_inf = jnp.float32(-jnp.inf)

    @pl.when(step == 0)
    def _():
        acc_ref[...] = jnp.full_like(acc_ref, neg_inf)

    h = h_ref[...].astype(jnp.float32)      # keep compute f32 even when streaming bf16
    bid = bid_ref[...]                      # [tn, 1] int32

    # Per-graph masked max for this tile, gathered into ONE dense [G, D] update
    # (single vector store per tile instead of G row read-modify-writes).
    # TODO(synk): for num_graphs >> 16, switch to lax.fori_loop + scalar-prefetched
    # per-graph node offsets (batch ids are contiguous) to avoid O(N*G*D) VPU/XLU work.
    tile_max = []
    for g in range(num_graphs):
        masked = jnp.where(bid == g, h, neg_inf)                    # [tn, D]
        tile_max.append(jnp.max(masked, axis=0, keepdims=True))     # [1, D]
    tile_max = jnp.concatenate(tile_max, axis=0)                    # [G, D]
    acc_ref[...] = jnp.maximum(acc_ref[...], tile_max)

    @pl.when(step == pl.num_programs(1) - 1)
    def _():
        o_ref[0] = acc_ref[...]             # single per-core writeback of [G, D]


def _combine_linear_kernel(part_ref, w_ref, b_ref, o_ref):
    """Cross-core max-combine -> empty graphs to 0 -> Linear. Runs once (no grid).

    part_ref: [C, G, D] per-core partial maxima (f32)
    w_ref:    [D, E] weight (pre-transposed in the wrapper)
    b_ref:    [1, E] bias
    o_ref:    [G, E] output
    """
    pooled = part_ref[0]
    for c in range(1, part_ref.shape[0]):
        pooled = jnp.maximum(pooled, part_ref[c])
    # Graphs with no selected nodes -> 0 (PyG scatter-max default). Assumes finite
    # node features (a legitimate -inf feature would also map to 0).
    pooled = jnp.where(pooled == -jnp.inf, jnp.float32(0.0), pooled)
    o_ref[...] = (jnp.dot(pooled, w_ref[...], preferred_element_type=jnp.float32)
                  + b_ref[...])


def dag_encoder_forward(h_node, batch, stage_mask, weight, bias, num_graphs, *,
                        node_tile=None, num_cores=1, stream_dtype=jnp.float32):
    """h_node: [N, D]; batch: [N] int; stage_mask: [N] bool;
    weight: [E, D] (torch Linear layout); bias: [E]. Returns [num_graphs, E] f32.

    node_tile:   rows of h processed per grid step (auto-picked if None).
    num_cores:   set 2 on v7x to shard the node stream across both TensorCores.
    stream_dtype: jnp.bfloat16 on v6e/v7x halves h's HBM traffic (compute stays f32).
    Nodes with batch id outside [0, num_graphs) are dropped (size=num_graphs)."""
    N, D = h_node.shape
    E = weight.shape[0]
    G = int(num_graphs)
    C = max(1, int(num_cores))

    w_de = weight.astype(jnp.float32).T          # [D, E]; one-time transpose in XLA
    b2 = bias.reshape(1, E).astype(jnp.float32)

    if G == 0:
        return jnp.zeros((0, E), jnp.float32)

    if N == 0:
        # No nodes at all -> every graph pools to 0 -> output is just the bias.
        partial = jnp.full((1, G, D), -jnp.inf, jnp.float32)
        return pl.pallas_call(
            _combine_linear_kernel,
            out_shape=jax.ShapeDtypeStruct((G, E), jnp.float32),
        )(partial, w_de, b2)

    h = h_node.astype(stream_dtype)
    h_item = jnp.dtype(stream_dtype).itemsize

    # ---- node tile: large (default 1024), capped so double-buffered inputs fit a
    # ~20 MiB VMEM budget (leaves headroom on v7x's 64 MiB VMEM). ----
    budget = 20 << 20
    per_row_dbl = 2 * (D * h_item + 4)           # 2 pipeline buffers x (h row + bid row)
    cap = max(8, budget // per_row_dbl)
    tn = 1024 if node_tile is None else int(node_tile)
    tn = int(min(tn, cap, ((N + 7) // 8) * 8))
    tn = max(8, (tn // 8) * 8)

    n_tiles = pl.cdiv(N, tn)
    tpc = pl.cdiv(n_tiles, C)                    # node tiles per core

    # Masked batch id: g in [0, G) if node is a selected (terminal) node of graph g,
    # else -1. Only this tiny column is padded (h is streamed unpadded).
    bid = jnp.where(stage_mask.astype(bool), batch.astype(jnp.int32), jnp.int32(-1))
    bid = bid[:, None]
    pad_rows = C * tpc * tn - N
    if pad_rows:
        bid = jnp.pad(bid, ((0, pad_rows), (0, 0)), constant_values=-1)

    # h is NOT padded: out-of-range grid steps clamp to the last real block; their
    # rows are ignored because the corresponding (padded) bid rows are -1. The last
    # real block may be partial -- its garbage tail rows are likewise deselected.
    def h_map(c, i):
        return (jnp.minimum(c * tpc + i, n_tiles - 1), 0)

    def bid_map(c, i):
        return (c * tpc + i, 0)

    in_bytes = 2 * tn * (D * h_item + 4)
    vmem_limit = int(min(48 << 20,
                         max(16 << 20, 2 * (in_bytes + 3 * G * D * 4) + (1 << 20))))

    partial = pl.pallas_call(
        functools.partial(_dag_pool_kernel, num_graphs=G),
        out_shape=jax.ShapeDtypeStruct((C, G, D), jnp.float32),
        grid=(C, tpc),
        in_specs=[
            pl.BlockSpec((tn, 1), bid_map),      # masked batch ids (4 bytes/node)
            pl.BlockSpec((tn, D), h_map),        # node embeddings, streamed once
        ],
        out_specs=pl.BlockSpec((1, G, D), lambda c, i: (c, 0, 0)),
        scratch_shapes=[pltpu.VMEM((G, D), jnp.float32)],     # running-max accumulator
        compiler_params=pltpu.CompilerParams(
            dimension_semantics=("parallel", "arbitrary"),    # cores x node-reduction
            vmem_limit_bytes=vmem_limit),
    )(bid, h)

    # Cross-core max-combine + empty-graph zeroing + Linear (tiny, single step).
    return pl.pallas_call(
        _combine_linear_kernel,
        out_shape=jax.ShapeDtypeStruct((G, E), jnp.float32),
    )(partial, w_de, b2)


def _reference(h_node, batch, stage_mask, weight, bias, num_graphs):
    """Pure-JAX reference of the same semantics."""
    G = int(num_graphs)
    sel = (batch[None, :] == jnp.arange(G)[:, None]) & stage_mask[None, :]   # [G, N]
    masked = jnp.where(sel[:, :, None], h_node[None, :, :], -jnp.inf)        # [G, N, D]
    pooled = jnp.max(masked, axis=1)
    pooled = jnp.where(pooled == -jnp.inf, 0.0, pooled)
    return pooled @ weight.T + bias


if __name__ == "__main__":
    key = jax.random.PRNGKey(0)
    k_h, k_m, k_w, k_b = jax.random.split(key, 4)

    # Small shapes consistent with the module's forward:
    num_nodes = 40          # N
    dim_node_emb = 16       # D
    dim_emb = 32            # E
    num_graphs = 4          # G

    h_node = jax.random.normal(k_h, (num_nodes, dim_node_emb), dtype=jnp.float32)
    # each graph owns a contiguous block of 10 nodes
    batch = jnp.repeat(jnp.arange(num_graphs, dtype=jnp.int32),
                       num_nodes // num_graphs)
    stage_mask = jax.random.bernoulli(k_m, p=0.5, shape=(num_nodes,))

    # Deterministic Linear(dim_node_emb, dim_emb) parameters (torch layout [E, D]).
    bound = 1.0 / (dim_node_emb ** 0.5)
    weight = jax.random.uniform(k_w, (dim_emb, dim_node_emb),
                                minval=-bound, maxval=bound, dtype=jnp.float32)
    bias = jax.random.uniform(k_b, (dim_emb,),
                              minval=-bound, maxval=bound, dtype=jnp.float32)

    ref = _reference(h_node, batch, stage_mask, weight, bias, num_graphs)

    # Default path (single core, auto tile -> one node tile here).
    out = dag_encoder_forward(h_node, batch, stage_mask, weight, bias, num_graphs)
    out = jax.block_until_ready(out)
    assert out.shape == (num_graphs, dim_emb)
    assert jnp.allclose(out, ref, atol=1e-5, rtol=1e-5), "mismatch vs reference"

    # Multi-tile path with an unpadded, partial last h block (exercises the
    # running-max accumulator and the clamped index map).
    out_t = dag_encoder_forward(h_node, batch, stage_mask, weight, bias, num_graphs,
                                node_tile=16)
    assert jnp.allclose(jax.block_until_ready(out_t), ref, atol=1e-5, rtol=1e-5), \
        "tiled mismatch"

    # Dual-core split (v7x megacore layout; correct on single-core chips too).
    out_2c = dag_encoder_forward(h_node, batch, stage_mask, weight, bias, num_graphs,
                                 node_tile=16, num_cores=2)
    assert jnp.allclose(jax.block_until_ready(out_2c), ref, atol=1e-5, rtol=1e-5), \
        "dual-core mismatch"

    # bf16 streaming (halves h's HBM traffic on v6e/v7x); in-kernel compute stays f32.
    out_bf16 = dag_encoder_forward(h_node, batch, stage_mask, weight, bias,
                                   num_graphs, stream_dtype=jnp.bfloat16)
    assert jnp.allclose(jax.block_until_ready(out_bf16), ref, atol=1e-1), \
        "bf16 mismatch"

    print("KERNEL_OK")
</pallas_src>

<mosaic_0001>
module attributes {stable_mosaic.version = 11 : i64} {
  func.func @_dag_pool_kernel(%arg0: i32, %arg1: i32, %arg2: memref<40x1xi32, #tpu.memory_space<vmem>>, %arg3: memref<40x16xf32, #tpu.memory_space<vmem>>, %arg4: memref<1x4x16xf32, #tpu.memory_space<vmem>>, %arg5: memref<4x16xf32, #tpu.memory_space<vmem>>) attributes {dimension_semantics = [#tpu.dimension_semantics<parallel>, #tpu.dimension_semantics<arbitrary>], iteration_bounds = array<i64: 1, 1>, scalar_prefetch = 0 : i64, scratch_operands = 1 : i64, tpu.core_type = #tpu.core_type<tc>, window_params = [{transform_indices = @transform_0, window_bounds = array<i64: 40, 1>}, {transform_indices = @transform_1, window_bounds = array<i64: 40, 16>}, {transform_indices = @transform_2, window_bounds = array<i64: 1, 4, 16>}]} {
    %c0_i32 = arith.constant 0 : i32
    %0 = arith.cmpi eq, %arg1, %c0_i32 : i32
    %1 = arith.extui %0 : i1 to i32
    %cst = arith.constant 0xFF800000 : f32
    %c0_i32_0 = arith.constant 0 : i32
    %2 = arith.cmpi ne, %1, %c0_i32_0 : i32
    scf.if %2 {
      %44 = vector.broadcast %cst : f32 to vector<4x16xf32>
      %c0_19 = arith.constant 0 : index
      %c0_20 = arith.constant 0 : index
      %45 = vector.load %arg5[%c0_19, %c0_20] : memref<4x16xf32, #tpu.memory_space<vmem>>, vector<4x16xf32>
      tpu.vector_store %arg5[%c0_19, %c0_20], %44 {strides = array<i32>} : memref<4x16xf32, #tpu.memory_space<vmem>>, vector<4x16xf32>,
    } else {
    }
    %c0 = arith.constant 0 : index
    %c0_1 = arith.constant 0 : index
    %3 = vector.load %arg3[%c0, %c0_1] : memref<40x16xf32, #tpu.memory_space<vmem>>, vector<40x16xf32>
    %c0_2 = arith.constant 0 : index
    %c0_3 = arith.constant 0 : index
    %4 = vector.load %arg2[%c0_2, %c0_3] : memref<40x1xi32, #tpu.memory_space<vmem>>, vector<40x1xi32>
    %c0_i32_4 = arith.constant 0 : i32
    %5 = vector.broadcast %c0_i32_4 : i32 to vector<40x1xi32>
    %6 = arith.cmpi eq, %4, %5 : vector<40x1xi32>
    %cst_5 = arith.constant 0xFF800000 : f32
    %7 = vector.shape_cast %6 : vector<40x1xi1> to vector<40x1xi1>
    %8 = vector.broadcast %7 : vector<40x1xi1> to vector<40x16xi1>
    %9 = vector.broadcast %cst_5 : f32 to vector<40x16xf32>
    %10 = arith.select %8, %3, %9 : vector<40x16xi1>, vector<40x16xf32>
    %cst_6 = arith.constant dense<0xFF800000> : vector<16xf32>
    %11 = vector.multi_reduction <maximumf>, %10, %cst_6 [0] : vector<40x16xf32> to vector<16xf32>
    %12 = vector.shape_cast %11 : vector<16xf32> to vector<1x16xf32>
    %c1_i32 = arith.constant 1 : i32
    %13 = vector.broadcast %c1_i32 : i32 to vector<40x1xi32>
    %14 = arith.cmpi eq, %4, %13 : vector<40x1xi32>
    %cst_7 = arith.constant 0xFF800000 : f32
    %15 = vector.shape_cast %14 : vector<40x1xi1> to vector<40x1xi1>
    %16 = vector.broadcast %15 : vector<40x1xi1> to vector<40x16xi1>
    %17 = vector.broadcast %cst_7 : f32 to vector<40x16xf32>
    %18 = arith.select %16, %3, %17 : vector<40x16xi1>, vector<40x16xf32>
    %cst_8 = arith.constant dense<0xFF800000> : vector<16xf32>
    %19 = vector.multi_reduction <maximumf>, %18, %cst_8 [0] : vector<40x16xf32> to vector<16xf32>
    %20 = vector.shape_cast %19 : vector<16xf32> to vector<1x16xf32>
    %c2_i32 = arith.constant 2 : i32
    %21 = vector.broadcast %c2_i32 : i32 to vector<40x1xi32>
    %22 = arith.cmpi eq, %4, %21 : vector<40x1xi32>
    %cst_9 = arith.constant 0xFF800000 : f32
    %23 = vector.shape_cast %22 : vector<40x1xi1> to vector<40x1xi1>
    %24 = vector.broadcast %23 : vector<40x1xi1> to vector<40x16xi1>
    %25 = vector.broadcast %cst_9 : f32 to vector<40x16xf32>
    %26 = arith.select %24, %3, %25 : vector<40x16xi1>, vector<40x16xf32>
    %cst_10 = arith.constant dense<0xFF800000> : vector<16xf32>
    %27 = vector.multi_reduction <maximumf>, %26, %cst_10 [0] : vector<40x16xf32> to vector<16xf32>
    %28 = vector.shape_cast %27 : vector<16xf32> to vector<1x16xf32>
    %c3_i32 = arith.constant 3 : i32
    %29 = vector.broadcast %c3_i32 : i32 to vector<40x1xi32>
    %30 = arith.cmpi eq, %4, %29 : vector<40x1xi32>
    %cst_11 = arith.constant 0xFF800000 : f32
    %31 = vector.shape_cast %30 : vector<40x1xi1> to vector<40x1xi1>
    %32 = vector.broadcast %31 : vector<40x1xi1> to vector<40x16xi1>
    %33 = vector.broadcast %cst_11 : f32 to vector<40x16xf32>
    %34 = arith.select %32, %3, %33 : vector<40x16xi1>, vector<40x16xf32>
    %cst_12 = arith.constant dense<0xFF800000> : vector<16xf32>
    %35 = vector.multi_reduction <maximumf>, %34, %cst_12 [0] : vector<40x16xf32> to vector<16xf32>
    %36 = vector.shape_cast %35 : vector<16xf32> to vector<1x16xf32>
    %37 = tpu.concatenate %12, %20, %28, %36 in 0 : vector<1x16xf32>, vector<1x16xf32>, vector<1x16xf32>, vector<1x16xf32> -> vector<4x16xf32>
    %c0_13 = arith.constant 0 : index
    %c0_14 = arith.constant 0 : index
    %38 = vector.load %arg5[%c0_13, %c0_14] : memref<4x16xf32, #tpu.memory_space<vmem>>, vector<4x16xf32>
    %39 = arith.maximumf %38, %37 : vector<4x16xf32>
    %c0_15 = arith.constant 0 : index
    %c0_16 = arith.constant 0 : index
    %40 = vector.load %arg5[%c0_15, %c0_16] : memref<4x16xf32, #tpu.memory_space<vmem>>, vector<4x16xf32>
    tpu.vector_store %arg5[%c0_15, %c0_16], %39 {strides = array<i32>} : memref<4x16xf32, #tpu.memory_space<vmem>>, vector<4x16xf32>,
    %c0_i32_17 = arith.constant 0 : i32
    %41 = arith.cmpi eq, %arg1, %c0_i32_17 : i32
    %42 = arith.extui %41 : i1 to i32
    %c0_i32_18 = arith.constant 0 : i32
    %43 = arith.cmpi ne, %42, %c0_i32_18 : i32
    scf.if %43 {
      %c0_19 = arith.constant 0 : index
      %c0_20 = arith.constant 0 : index
      %44 = vector.load %arg5[%c0_19, %c0_20] : memref<4x16xf32, #tpu.memory_space<vmem>>, vector<4x16xf32>
      %c0_21 = arith.constant 0 : index
      %c0_22 = arith.constant 0 : index
      %c0_23 = arith.constant 0 : index
      %45 = vector.load %arg4[%c0_21, %c0_22, %c0_23] : memref<1x4x16xf32, #tpu.memory_space<vmem>>, vector<1x4x16xf32>
      %46 = vector.shape_cast %45 : vector<1x4x16xf32> to vector<4x16xf32>
      %47 = vector.shape_cast %44 : vector<4x16xf32> to vector<1x4x16xf32>
      tpu.vector_store %arg4[%c0_21, %c0_22, %c0_23], %47 {strides = array<i32>} : memref<1x4x16xf32, #tpu.memory_space<vmem>>, vector<1x4x16xf32>,
    } else {
    }
    return
  }
  func.func @transform_0(%arg0: i32, %arg1: i32) -> (i32, i32) {
    %c1_i32 = arith.constant 1 : i32
    %0 = arith.muli %arg0, %c1_i32 : i32
    %1 = arith.addi %0, %arg1 : i32
    %c0_i32 = arith.constant 0 : i32
    %c0_i32_0 = arith.constant 0 : i32
    return %1, %c0_i32 : i32, i32
  }
  func.func @transform_1(%arg0: i32, %arg1: i32) -> (i32, i32) {
    %c1_i32 = arith.constant 1 : i32
    %0 = arith.muli %arg0, %c1_i32 : i32
    %1 = arith.addi %0, %arg1 : i32
    %c0_i32 = arith.constant 0 : i32
    %2 = arith.minsi %1, %c0_i32 : i32
    %c0_i32_0 = arith.constant 0 : i32
    %c0_i32_1 = arith.constant 0 : i32
    return %2, %c0_i32_0 : i32, i32
  }
  func.func @transform_2(%arg0: i32, %arg1: i32) -> (i32, i32, i32) {
    %c0_i32 = arith.constant 0 : i32
    %c0_i32_0 = arith.constant 0 : i32
    %c0_i32_1 = arith.constant 0 : i32
    return %arg0, %c0_i32, %c0_i32_0 : i32, i32, i32
  }
}

</mosaic_0001>

<llo_original>
// kernel: tpu_custom_call.1
$region0: #{tpu_custom_call.1}
  #allocation0 [shape = 'u32[]', space=smem, size = 0x4, offset = 0x4, fixed_abs, tag = 'smem constant byte address 0x4 - core index']
  #allocation1 [shape = 'u32[144,128]{1,0:T(1,128)}', space=vmem, size = 0x12000, scoped, tag = 'internal scratch']
  #allocation2 [shape = 'f32[4,16]{1,0:T(4,128)}', space=vmem, size = 0x800, scoped, tag = 'scratch operand']
  %s0 = inlined_call_operand.vmem [shape: s32[40,1], index: 0, kind: input, shape index: {}]
  %s1 = inlined_call_operand.vmem [shape: f32[40,16], index: 1, kind: input, shape index: {}]
  %s2 = inlined_call_operand.hbm [shape: f32[1,4,16], index: 2, kind: output, shape index: {}]
  %s3 = sld [smem:[#allocation0]]
  $region26: #{tpu_custom_call.1} parent=0
    _
  %s5 = ssub.s32 1, %s3
  %s6 = scalar_select 0, %s5, %s3
  $region1: #{tpu_custom_call.1} parent=0
    #allocation3 [shape = 'u8[2048]{0}', space=vmem, size = 0x800, scoped, tag = 'output window, operand 0, single buffered']
    #allocation4 [shape = 's32[1]{0}', space=sflag, size = 0x4, scoped, tag = 'scoped memory for tpu_custom_call.1']
    %7 = vsyncpa [#allocation4], 0
    // Predicated region
    $region2: #{tpu_custom_call.1} parent=1 // pred_check
      _
    $region3: #{tpu_custom_call.1} parent=1 // pred_check_branch
      %9 = sbr.rel (0) target = $region5
    $region4: #{tpu_custom_call.1} parent=1 // pred_region
      %s10 = sadd.s32 0, 0
      %s11 = smul.u32 5, %s10
      %p12 = scmp.lt.s32.totalorder %s11, 4
      %s13 = scalar_select %p12, %s11, 4
      %s14 = smul.addr %s13, 8
      %s15 = scalar_lea.vmem %s0, %s14
      %s16 = sadd.s32 0, 0
      %s17 = smul.u32 5, %s16
    $region5: #{tpu_custom_call.1} parent=1 // pred_fallthru
      _
    // Predicated region
    $region6: #{tpu_custom_call.1} parent=1 // pred_check
      _
    $region7: #{tpu_custom_call.1} parent=1 // pred_check_branch
      %19 = sbr.rel (0) target = $region9
    $region8: #{tpu_custom_call.1} parent=1 // pred_region
      %s20 = sadd.s32 0, 0
      %p21 = scmp.lt.s32.totalorder %s20, 0
      %s22 = scalar_select %p21, %s20, 0
      %s23 = smul.u32 5, %s22
      %p24 = scmp.lt.s32.totalorder %s23, 4
      %s25 = scalar_select %p24, %s23, 4
      %s26 = smul.addr %s25, 8
      %s27 = scalar_lea.vmem %s1, %s26
      %s28 = sadd.s32 0, 0
      %p29 = scmp.lt.s32.totalorder %s28, 0
      %s30 = scalar_select %p29, %s28, 0
      %s31 = smul.u32 5, %s30
    $region9: #{tpu_custom_call.1} parent=1 // pred_fallthru
      _
    %s32 = sadd.s32 0, 0
    %s33 = smul.u32 5, %s32
    %p34 = scmp.lt.s32.totalorder %s33, 4
    %s35 = scalar_select %p34, %s33, 4
    %s36 = smul.addr %s35, 8
    %s37 = scalar_lea.vmem %s0, %s36
    %s38 = sadd.s32 0, 0
    %p39 = scmp.lt.s32.totalorder %s38, 0
    %s40 = scalar_select %p39, %s38, 0
    %s41 = smul.u32 5, %s40
    %p42 = scmp.lt.s32.totalorder %s41, 4
    %s43 = scalar_select %p42, %s41, 4
    %s44 = smul.addr %s43, 8
    %s45 = scalar_lea.vmem %s1, %s44
    %s46 = sadd.s32 0, 0
    %s47 = smul.u32 5, %s46
    %p48 = scmp.lt.s32.totalorder %s47, 4
    %s49 = scalar_select %p48, %s47, 4
    %s50 = smul.addr %s49, 8
    %s51 = scalar_lea.vmem %s0, %s50
    %s52 = sadd.s32 0, 0
    %s53 = smul.u32 5, %s52
    %s54 = sadd.s32 0, 0
    %p55 = scmp.lt.s32.totalorder %s54, 0
    %s56 = scalar_select %p55, %s54, 0
    %s57 = smul.u32 5, %s56
    %p58 = scmp.lt.s32.totalorder %s57, 4
    %s59 = scalar_select %p58, %s57, 4
    %s60 = smul.addr %s59, 8
    %s61 = scalar_lea.vmem %s1, %s60
    %s62 = sadd.s32 0, 0
    %p63 = scmp.lt.s32.totalorder %s62, 0
    %s64 = scalar_select %p63, %s62, 0
    %s65 = smul.u32 5, %s64
    %p66 = scmp.eq.s32.totalorder 0, 0
    // Predicated region
    $region10: #{tpu_custom_call.1} parent=1 // pred_check
      %p67 = pneg %p66
    $region11: #{tpu_custom_call.1} parent=1 // pred_check_branch
      %69 = sbr.rel (%p67) target = $region13
    $region12: #{tpu_custom_call.1} parent=1 // pred_region
      %vm70 = vcmask 125952
      %71 = vst.msk [vmem:[#allocation2] sm:$0xf] %vm70, -inf
    $region13: #{tpu_custom_call.1} parent=1 // pred_fallthru
      _
    %v72 = vld [vmem:[%s61] sm:$0xff]
    %v73 = vld [vmem:[%s61 + $0x8] sm:$0xff]
    %v74 = vld [vmem:[%s61 + $0x10] sm:$0xff]
    %v75 = vld [vmem:[%s61 + $0x18] sm:$0xff]
    %v76 = vld [vmem:[%s61 + $0x20] sm:$0xff]
    %v77 = vld [vmem:[%s51] sm:$0xff]
    %v78 = vld [vmem:[%s51 + $0x8] sm:$0xff]
    %v79 = vld [vmem:[%s51 + $0x10] sm:$0xff]
    %v80 = vld [vmem:[%s51 + $0x18] sm:$0xff]
    %v81 = vld [vmem:[%s51 + $0x20] sm:$0xff]
    %vm82 = vcmp.eq.s32.totalorder %v77, 0
    %vm83 = vcmp.eq.s32.totalorder %v78, 0
    %vm84 = vcmp.eq.s32.totalorder %v79, 0
    %vm85 = vcmp.eq.s32.totalorder %v80, 0
    %vm86 = vcmp.eq.s32.totalorder %v81, 0
    %v87 = vsel %vm82, 1, 0
    %v88 = vsel %vm83, 1, 0
    %v89 = vsel %vm84, 1, 0
    %v90 = vsel %vm85, 1, 0
    %v91 = vsel %vm86, 1, 0
    %92 = vset.pattern.permute.xlu0 0
    %93 = vperm.xlu0 %92, %v87
    %v94 = vpop.permute.xlu0 %93
    %95 = vset.pattern.permute.xlu0 0
    %96 = vperm.xlu0 %95, %v88
    %v97 = vpop.permute.xlu0 %96
    %98 = vset.pattern.permute.xlu0 0
    %99 = vperm.xlu0 %98, %v89
    %v100 = vpop.permute.xlu0 %99
    %101 = vset.pattern.permute.xlu0 0
    %102 = vperm.xlu0 %101, %v90
    %v103 = vpop.permute.xlu0 %102
    %104 = vset.pattern.permute.xlu0 0
    %105 = vperm.xlu0 %104, %v91
    %v106 = vpop.permute.xlu0 %105
    %vm107 = vcmp.eq.s32.totalorder %v94, 1
    %vm108 = vcmp.eq.s32.totalorder %v97, 1
    %vm109 = vcmp.eq.s32.totalorder %v100, 1
    %vm110 = vcmp.eq.s32.totalorder %v103, 1
    %vm111 = vcmp.eq.s32.totalorder %v106, 1
    %v112 = vsel %vm107, %v72, -inf
    %v113 = vsel %vm108, %v73, -inf
    %v114 = vsel %vm109, %v74, -inf
    %v115 = vsel %vm110, %v75, -inf
    %v116 = vsel %vm111, %v76, -inf
    %vm117 = vcmask 130048
    %v118 = vsel %vm117, %v112, -inf
    %v119 = vsel %vm117, %v113, -inf
    %v120 = vsel %vm117, %v114, -inf
    %v121 = vsel %vm117, %v115, -inf
    %v122 = vsel %vm117, %v116, -inf
    %v123 = vmax.f32 %v118, %v122
    %v124 = vmax.f32 %v123, %v119
    %v125 = vmax.f32 %v120, %v121
    %v126 = vmax.f32 %v124, %v125
    %v127 = vrot.slane %v126, 4
    %v128 = vmax.f32 %v126, %v127
    %v129 = vrot.slane %v128, 2
    %v130 = vmax.f32 %v128, %v129
    %v131 = vrot.slane %v130, 1
    %v132 = vmax.f32 %v130, %v131
    %vm133 = vcmp.eq.s32.totalorder %v77, 1
    %vm134 = vcmp.eq.s32.totalorder %v78, 1
    %vm135 = vcmp.eq.s32.totalorder %v79, 1
    %vm136 = vcmp.eq.s32.totalorder %v80, 1
    %vm137 = vcmp.eq.s32.totalorder %v81, 1
    %v138 = vsel %vm133, 1, 0
    %v139 = vsel %vm134, 1, 0
    %v140 = vsel %vm135, 1, 0
    %v141 = vsel %vm136, 1, 0
    %v142 = vsel %vm137, 1, 0
    %143 = vset.pattern.permute.xlu0 0
    %144 = vperm.xlu0 %143, %v138
    %v145 = vpop.permute.xlu0 %144
    %146 = vset.pattern.permute.xlu0 0
    %147 = vperm.xlu0 %146, %v139
    %v148 = vpop.permute.xlu0 %147
    %149 = vset.pattern.permute.xlu0 0
    %150 = vperm.xlu0 %149, %v140
    %v151 = vpop.permute.xlu0 %150
    %152 = vset.pattern.permute.xlu0 0
    %153 = vperm.xlu0 %152, %v141
    %v154 = vpop.permute.xlu0 %153
    %155 = vset.pattern.permute.xlu0 0
    %156 = vperm.xlu0 %155, %v142
    %v157 = vpop.permute.xlu0 %156
    %vm158 = vcmp.eq.s32.totalorder %v145, 1
    %vm159 = vcmp.eq.s32.totalorder %v148, 1
    %vm160 = vcmp.eq.s32.totalorder %v151, 1
    %vm161 = vcmp.eq.s32.totalorder %v154, 1
    %vm162 = vcmp.eq.s32.totalorder %v157, 1
    %v163 = vsel %vm158, %v72, -inf
    %v164 = vsel %vm159, %v73, -inf
    %v165 = vsel %vm160, %v74, -inf
    %v166 = vsel %vm161, %v75, -inf
    %v167 = vsel %vm162, %v76, -inf
    %v168 = vsel %vm117, %v163, -inf
    %v169 = vsel %vm117, %v164, -inf
    %v170 = vsel %vm117, %v165, -inf
    %v171 = vsel %vm117, %v166, -inf
    %v172 = vsel %vm117, %v167, -inf
    %v173 = vmax.f32 %v168, %v172
    %v174 = vmax.f32 %v173, %v169
    %v175 = vmax.f32 %v170, %v171
    %v176 = vmax.f32 %v174, %v175
    %v177 = vrot.slane %v176, 4
    %v178 = vmax.f32 %v176, %v177
    %v179 = vrot.slane %v178, 2
    %v180 = vmax.f32 %v178, %v179
    %v181 = vrot.slane %v180, 1
    %v182 = vmax.f32 %v180, %v181
    %vm183 = vcmp.eq.s32.totalorder %v77, 2
    %vm184 = vcmp.eq.s32.totalorder %v78, 2
    %vm185 = vcmp.eq.s32.totalorder %v79, 2
    %vm186 = vcmp.eq.s32.totalorder %v80, 2
    %vm187 = vcmp.eq.s32.totalorder %v81, 2
    %v188 = vsel %vm183, 1, 0
    %v189 = vsel %vm184, 1, 0
    %v190 = vsel %vm185, 1, 0
    %v191 = vsel %vm186, 1, 0
    %v192 = vsel %vm187, 1, 0
    %193 = vset.pattern.permute.xlu0 0
    %194 = vperm.xlu0 %193, %v188
    %v195 = vpop.permute.xlu0 %194
    %196 = vset.pattern.permute.xlu0 0
    %197 = vperm.xlu0 %196, %v189
    %v198 = vpop.permute.xlu0 %197
    %199 = vset.pattern.permute.xlu0 0
    %200 = vperm.xlu0 %199, %v190
    %v201 = vpop.permute.xlu0 %200
    %202 = vset.pattern.permute.xlu0 0
    %203 = vperm.xlu0 %202, %v191
    %v204 = vpop.permute.xlu0 %203
    %205 = vset.pattern.permute.xlu0 0
    %206 = vperm.xlu0 %205, %v192
    %v207 = vpop.permute.xlu0 %206
    %vm208 = vcmp.eq.s32.totalorder %v195, 1
    %vm209 = vcmp.eq.s32.totalorder %v198, 1
    %vm210 = vcmp.eq.s32.totalorder %v201, 1
    %vm211 = vcmp.eq.s32.totalorder %v204, 1
    %vm212 = vcmp.eq.s32.totalorder %v207, 1
    %v213 = vsel %vm208, %v72, -inf
    %v214 = vsel %vm209, %v73, -inf
    %v215 = vsel %vm210, %v74, -inf
    %v216 = vsel %vm211, %v75, -inf
    %v217 = vsel %vm212, %v76, -inf
    %v218 = vsel %vm117, %v213, -inf
    %v219 = vsel %vm117, %v214, -inf
    %v220 = vsel %vm117, %v215, -inf
    %v221 = vsel %vm117, %v216, -inf
    %v222 = vsel %vm117, %v217, -inf
    %v223 = vmax.f32 %v218, %v222
    %v224 = vmax.f32 %v223, %v219
    %v225 = vmax.f32 %v220, %v221
    %v226 = vmax.f32 %v224, %v225
    %v227 = vrot.slane %v226, 4
    %v228 = vmax.f32 %v226, %v227
    %v229 = vrot.slane %v228, 2
    %v230 = vmax.f32 %v228, %v229
    %v231 = vrot.slane %v230, 1
    %v232 = vmax.f32 %v230, %v231
    %vm233 = vcmp.eq.s32.totalorder %v77, 3
    %vm234 = vcmp.eq.s32.totalorder %v78, 3
    %vm235 = vcmp.eq.s32.totalorder %v79, 3
    %vm236 = vcmp.eq.s32.totalorder %v80, 3
    %vm237 = vcmp.eq.s32.totalorder %v81, 3
    %v238 = vsel %vm233, 1, 0
    %v239 = vsel %vm234, 1, 0
    %v240 = vsel %vm235, 1, 0
    %v241 = vsel %vm236, 1, 0
    %v242 = vsel %vm237, 1, 0
    %243 = vset.pattern.permute.xlu0 0
    %244 = vperm.xlu0 %243, %v238
    %v245 = vpop.permute.xlu0 %244
    %246 = vset.pattern.permute.xlu0 0
    %247 = vperm.xlu0 %246, %v239
    %v248 = vpop.permute.xlu0 %247
    %249 = vset.pattern.permute.xlu0 0
    %250 = vperm.xlu0 %249, %v240
    %v251 = vpop.permute.xlu0 %250
    %252 = vset.pattern.permute.xlu0 0
    %253 = vperm.xlu0 %252, %v241
    %v254 = vpop.permute.xlu0 %253
    %255 = vset.pattern.permute.xlu0 0
    %256 = vperm.xlu0 %255, %v242
    %v257 = vpop.permute.xlu0 %256
    %vm258 = vcmp.eq.s32.totalorder %v245, 1
    %vm259 = vcmp.eq.s32.totalorder %v248, 1
    %vm260 = vcmp.eq.s32.totalorder %v251, 1
    %vm261 = vcmp.eq.s32.totalorder %v254, 1
    %vm262 = vcmp.eq.s32.totalorder %v257, 1
    %v263 = vsel %vm258, %v72, -inf
    %v264 = vsel %vm259, %v73, -inf
    %v265 = vsel %vm260, %v74, -inf
    %v266 = vsel %vm261, %v75, -inf
    %v267 = vsel %vm262, %v76, -inf
    %v268 = vsel %vm117, %v263, -inf
    %v269 = vsel %vm117, %v264, -inf
    %v270 = vsel %vm117, %v265, -inf
    %v271 = vsel %vm117, %v266, -inf
    %v272 = vsel %vm117, %v267, -inf
    %v273 = vmax.f32 %v268, %v272
    %v274 = vmax.f32 %v273, %v269
    %v275 = vmax.f32 %v270, %v271
    %v276 = vmax.f32 %v274, %v275
    %v277 = vrot.slane %v276, 4
    %v278 = vmax.f32 %v276, %v277
    %v279 = vrot.slane %v278, 2
    %v280 = vmax.f32 %v278, %v279
    %v281 = vrot.slane %v280, 1
    %v282 = vmax.f32 %v280, %v281
    %vm283 = vcmask 1040384
    %v284 = vsel %vm283, %v132, %v182
    %vm285 = vcmask 1041408
    %v286 = vsel %vm285, %v284, %v232
    %vm287 = vcmask 1042432
    %v288 = vsel %vm287, %v286, %v282
    %v289 = vld [vmem:[#allocation2] sm:$0xf]
    %v290 = vmax.f32 %v289, %v288
    %vm291 = vcmask 125952
    %292 = vst.msk [vmem:[#allocation2] sm:$0xf] %vm291, %v290
    // Predicated region
    $region14: #{tpu_custom_call.1} parent=1 // pred_check
      %p293 = pneg %p66
    $region15: #{tpu_custom_call.1} parent=1 // pred_check_branch
      %295 = sbr.rel (%p293) target = $region17
    $region16: #{tpu_custom_call.1} parent=1 // pred_region
      %v296 = vld [vmem:[#allocation2] sm:$0xf]
      %297 = vst.msk [vmem:[#allocation3] sm:$0xf] %vm291, %v296
    $region17: #{tpu_custom_call.1} parent=1 // pred_fallthru
      _
    // Predicated region
    $region18: #{tpu_custom_call.1} parent=1 // pred_check
      _
    $region19: #{tpu_custom_call.1} parent=1 // pred_check_branch
      %299 = sbr.rel (0) target = $region21
    $region20: #{tpu_custom_call.1} parent=1 // pred_region
      %s301 = ssub.s32 64, 64
      %302 = vsyncadd [#allocation4], %s301
      %s304 = sshll.u32 [#allocation3], 4
      %s305 = int_to_ptr.vmem [resolvable:$true] %s304
      %307 = dma.vmem_to_hbm [thread:$0]  %s305, 64, %s2, [#allocation4]
    $region21: #{tpu_custom_call.1} parent=1 // pred_fallthru
      _
    // Predicated region
    $region22: #{tpu_custom_call.1} parent=1 // pred_check
      _
    $region23: #{tpu_custom_call.1} parent=1 // pred_check_branch
      %309 = sbr.rel (0) target = $region25
    $region24: #{tpu_custom_call.1} parent=1 // pred_region
      %310 = dma.done [#allocation4], 64
    $region25: #{tpu_custom_call.1} parent=1 // pred_fallthru
      _
    %311 = vsyncpa [#allocation4], 1

</llo_original>
